<compile_context>
chip_gen: v5e
topology: v5e:2x2
jax: 0.10.0
libtpu: 0.0.40
codegen_flags: <defaults>
</compile_context>

<pallas_src>
import jax
import jax.numpy as jnp
from jax.experimental import pallas as pl
from jax.experimental.pallas import tpu as pltpu


def _round_up(a, b):
    return (a + b - 1) // b * b


def patch_embed_kernel(x_ref, w_ref, p_ref, o_ref):
    # x_ref: (TM, K) patch rows (compute dtype, e.g. bf16)
    # w_ref: (K, E)  projection weight (compute dtype, resident across grid)
    # p_ref: (3, E)  f32 [conv bias; LN gamma; LN beta]
    # o_ref: (TM, E) output tile (compute dtype)
    # Conv-as-matmul on the MXU: native-dtype operands, f32 accumulation.
    y = jnp.dot(x_ref[...], w_ref[...], preferred_element_type=jnp.float32)
    y = y + p_ref[0:1, :]                       # conv bias (f32)

    # LayerNorm over embed_dim, two-pass statistics in f32 (eps=1e-5).
    inv_e = 1.0 / y.shape[-1]
    mean = jnp.sum(y, axis=-1, keepdims=True) * inv_e
    yc = y - mean
    var = jnp.sum(yc * yc, axis=-1, keepdims=True) * inv_e
    y = yc * (jax.lax.rsqrt(var + 1e-5) * p_ref[1:2, :]) + p_ref[2:3, :]
    o_ref[...] = y.astype(o_ref.dtype)


def im2col_nhwc(x, k, stride, pad, compute_dtype):
    """x: (B, C, H, W) -> (B*Ho*Wo, k*k*C) patch matrix, feature order (kh, kw, c).

    The stack axis sits immediately before C, so the final reshape is a
    row-major no-op — no relayout pass over the inflated patch matrix. The only
    transpose is of the original (small) input to NHWC."""
    B, C, H, W = x.shape
    Ho = (H + 2 * pad - k) // stride + 1
    Wo = (W + 2 * pad - k) // stride + 1
    xn = jnp.transpose(x.astype(compute_dtype), (0, 2, 3, 1))        # (B,H,W,C)
    xp = jnp.pad(xn, ((0, 0), (pad, pad), (pad, pad), (0, 0)))
    cols = [
        xp[:, dh:dh + Ho * stride:stride, dw:dw + Wo * stride:stride, :]
        for dh in range(k) for dw in range(k)
    ]                                                                 # 49x(B,Ho,Wo,C)
    cols = jnp.stack(cols, axis=3)                                    # (B,Ho,Wo,k*k,C)
    return cols.reshape(B * Ho * Wo, k * k * C), Ho, Wo


def patch_embedding(x, w_conv, b_conv, gamma, beta, *, patch_size=7, stride=4,
                    compute_dtype=jnp.bfloat16, out_dtype=None, block_rows=1024):
    """Equivalent of PatchEmbedding.forward. x: (B, C, H, W) NCHW.
    Returns (tokens (B, N, E), H_out, W_out). Output dtype defaults to
    compute_dtype (bf16) to halve write traffic; pass out_dtype=jnp.float32
    for the exact PyTorch dtype."""
    B, C, H, W = x.shape
    E = w_conv.shape[0]
    k = patch_size
    pad = patch_size // 2
    if out_dtype is None:
        out_dtype = compute_dtype

    x_col, Ho, Wo = im2col_nhwc(x, k, stride, pad, compute_dtype)
    N = Ho * Wo
    K = C * k * k
    M = B * N

    # Weight flattened in the same (kh, kw, c) order as the patch features.
    w_mat = jnp.transpose(w_conv, (2, 3, 1, 0)).reshape(K, E).astype(compute_dtype)
    # conv bias / LN gamma / LN beta merged into one resident f32 operand.
    params = jnp.stack([b_conv, gamma, beta]).astype(jnp.float32)     # (3, E)

    # Row tile: multiple of 8 sublanes, large (default 1024) for long DMA
    # bursts / low per-step overhead.  Keep >= 2 row tiles so v7x's two
    # TensorCores both get work via the "parallel" grid axis.
    tm = min(block_rows, _round_up(M, 8))
    if M > 8 and pl.cdiv(M, tm) < 2:
        tm = _round_up(pl.cdiv(M, 2), 8)
    grid = (pl.cdiv(M, tm),)

    in_bytes = jnp.dtype(compute_dtype).itemsize
    out_bytes = jnp.dtype(out_dtype).itemsize
    cost = pl.CostEstimate(
        flops=2 * M * K * E,
        transcendentals=0,
        bytes_accessed=M * K * in_bytes + K * E * in_bytes + 3 * E * 4
        + M * E * out_bytes,
    )

    out = pl.pallas_call(
        patch_embed_kernel,
        out_shape=jax.ShapeDtypeStruct((M, E), out_dtype),
        grid_spec=pltpu.PrefetchScalarGridSpec(
            num_scalar_prefetch=0,
            grid=grid,
            in_specs=[
                pl.BlockSpec((tm, K), lambda i: (i, 0)),   # streaming patch rows
                pl.BlockSpec((K, E), lambda i: (0, 0)),    # weight (constant idx -> no re-DMA)
                pl.BlockSpec((3, E), lambda i: (0, 0)),    # bias / gamma / beta
            ],
            out_specs=pl.BlockSpec((tm, E), lambda i: (i, 0)),
        ),
        compiler_params=pltpu.CompilerParams(
            dimension_semantics=("parallel",),
            # Explicit scoped-VMEM budget: generous vs this kernel's few-MiB
            # footprint, above v5e's 16 MiB default, within v7x's 64 MiB.
            vmem_limit_bytes=32 * 1024 * 1024,
        ),
        cost_estimate=cost,
    )(x_col, w_mat, params)

    return out.reshape(B, N, E), Ho, Wo


def patch_embedding_ref(x, w_conv, b_conv, gamma, beta, *, patch_size=7, stride=4):
    """Pure-JAX f32 reference (mirrors the PyTorch module)."""
    pad = patch_size // 2
    y = jax.lax.conv_general_dilated(
        x, w_conv, window_strides=(stride, stride),
        padding=((pad, pad), (pad, pad)),
        dimension_numbers=("NCHW", "OIHW", "NCHW"),
    ) + b_conv[None, :, None, None]
    B, E, Ho, Wo = y.shape
    y = y.reshape(B, E, Ho * Wo).transpose(0, 2, 1)                   # (B, N, E)
    mean = jnp.mean(y, axis=-1, keepdims=True)
    var = jnp.mean((y - mean) ** 2, axis=-1, keepdims=True)
    y = (y - mean) * jax.lax.rsqrt(var + 1e-5)
    return y * gamma + beta, Ho, Wo


if __name__ == "__main__":
    # Small shapes consistent with the module's forward (module defaults:
    # in_chans=3, embed_dim=64, patch_size=7, stride=4).
    B, C, H, W = 2, 3, 16, 16
    E = 64
    patch_size, stride = 7, 4

    key = jax.random.PRNGKey(0)
    k_x, k_w, k_b, k_g, k_beta = jax.random.split(key, 5)

    x = jax.random.normal(k_x, (B, C, H, W), dtype=jnp.float32)
    # Conv2d weight is (out_ch, in_ch, kh, kw)
    w_conv = jax.random.normal(k_w, (E, C, patch_size, patch_size), dtype=jnp.float32) * 0.02
    b_conv = jax.random.normal(k_b, (E,), dtype=jnp.float32) * 0.02
    gamma = jnp.ones((E,), dtype=jnp.float32) + 0.1 * jax.random.normal(k_g, (E,), dtype=jnp.float32)
    beta = 0.1 * jax.random.normal(k_beta, (E,), dtype=jnp.float32)

    tokens, Ho, Wo = patch_embedding(
        x, w_conv, b_conv, gamma, beta, patch_size=patch_size, stride=stride
    )
    tokens = jax.block_until_ready(tokens)
    assert tokens.shape == (B, Ho * Wo, E), tokens.shape

    ref, Ho_r, Wo_r = patch_embedding_ref(
        x, w_conv, b_conv, gamma, beta, patch_size=patch_size, stride=stride
    )
    assert (Ho, Wo) == (Ho_r, Wo_r)
    # bf16 MXU operands AND bf16 output vs f32 reference: loose tolerance.
    err = jnp.abs(tokens.astype(jnp.float32) - ref)
    max_err = float(jnp.max(err))
    mean_err = float(jnp.mean(err))
    assert max_err < 1e-1 and mean_err < 1e-2, (max_err, mean_err)
    print("KERNEL_OK")
</pallas_src>

<mosaic_0001>
module attributes {stable_mosaic.version = 11 : i64} {
  func.func @patch_embed_kernel(%arg0: i32, %arg1: memref<16x147xbf16, #tpu.memory_space<vmem>>, %arg2: memref<147x64xbf16, #tpu.memory_space<vmem>>, %arg3: memref<3x64xf32, #tpu.memory_space<vmem>>, %arg4: memref<16x64xbf16, #tpu.memory_space<vmem>>) attributes {dimension_semantics = [#tpu.dimension_semantics<parallel>], iteration_bounds = array<i64: 2>, scalar_prefetch = 0 : i64, scratch_operands = 0 : i64, tpu.core_type = #tpu.core_type<tc>, window_params = [{transform_indices = @transform_0, window_bounds = array<i64: 16, 147>}, {pipeline_mode = #tpu.pipeline_mode<synchronous>, transform_indices = @transform_1, window_bounds = array<i64: 147, 64>}, {pipeline_mode = #tpu.pipeline_mode<synchronous>, transform_indices = @transform_2, window_bounds = array<i64: 3, 64>}, {transform_indices = @transform_3, window_bounds = array<i64: 16, 64>}]} {
    %c0 = arith.constant 0 : index
    %c0_0 = arith.constant 0 : index
    %0 = vector.load %arg1[%c0, %c0_0] : memref<16x147xbf16, #tpu.memory_space<vmem>>, vector<16x147xbf16>
    %c0_1 = arith.constant 0 : index
    %c0_2 = arith.constant 0 : index
    %1 = vector.load %arg2[%c0_1, %c0_2] : memref<147x64xbf16, #tpu.memory_space<vmem>>, vector<147x64xbf16>
    %cst = arith.constant dense<0.000000e+00> : vector<16x64xf32>
    %2 = tpu.matmul %0, %1, %cst {dimension_numbers = #tpu.dot_dimension_numbers<[1], [0], [0], [1], [0, 0, 1, 1], [], []>} : vector<16x147xbf16>, vector<147x64xbf16>, vector<16x64xf32> -> vector<16x64xf32>
    %c0_3 = arith.constant 0 : index
    %c0_4 = arith.constant 0 : index
    %3 = vector.load %arg3[%c0_3, %c0_4] : memref<3x64xf32, #tpu.memory_space<vmem>>, vector<1x64xf32>
    %4 = vector.broadcast %3 : vector<1x64xf32> to vector<16x64xf32>
    %5 = arith.addf %2, %4 : vector<16x64xf32>
    %cst_5 = arith.constant dense<0.000000e+00> : vector<16xf32>
    %6 = vector.multi_reduction <add>, %5, %cst_5 [1] : vector<16x64xf32> to vector<16xf32>
    %7 = vector.shape_cast %6 : vector<16xf32> to vector<16x1xf32>
    %cst_6 = arith.constant 1.562500e-02 : f32
    %8 = vector.broadcast %cst_6 : f32 to vector<16x1xf32>
    %9 = arith.mulf %7, %8 : vector<16x1xf32>
    %10 = vector.broadcast %9 : vector<16x1xf32> to vector<16x64xf32>
    %11 = arith.subf %5, %10 : vector<16x64xf32>
    %12 = arith.mulf %11, %11 : vector<16x64xf32>
    %cst_7 = arith.constant dense<0.000000e+00> : vector<16xf32>
    %13 = vector.multi_reduction <add>, %12, %cst_7 [1] : vector<16x64xf32> to vector<16xf32>
    %14 = vector.shape_cast %13 : vector<16xf32> to vector<16x1xf32>
    %cst_8 = arith.constant 1.562500e-02 : f32
    %15 = vector.broadcast %cst_8 : f32 to vector<16x1xf32>
    %16 = arith.mulf %14, %15 : vector<16x1xf32>
    %cst_9 = arith.constant 9.99999974E-6 : f32
    %17 = vector.broadcast %cst_9 : f32 to vector<16x1xf32>
    %18 = arith.addf %16, %17 : vector<16x1xf32>
    %19 = math.rsqrt %18 : vector<16x1xf32>
    %c1 = arith.constant 1 : index
    %c0_10 = arith.constant 0 : index
    %20 = vector.load %arg3[%c1, %c0_10] : memref<3x64xf32, #tpu.memory_space<vmem>>, vector<1x64xf32>
    %21 = vector.broadcast %19 : vector<16x1xf32> to vector<16x64xf32>
    %22 = vector.broadcast %20 : vector<1x64xf32> to vector<16x64xf32>
    %23 = arith.mulf %21, %22 : vector<16x64xf32>
    %24 = arith.mulf %11, %23 : vector<16x64xf32>
    %c2 = arith.constant 2 : index
    %c0_11 = arith.constant 0 : index
    %25 = vector.load %arg3[%c2, %c0_11] : memref<3x64xf32, #tpu.memory_space<vmem>>, vector<1x64xf32>
    %26 = vector.broadcast %25 : vector<1x64xf32> to vector<16x64xf32>
    %27 = arith.addf %24, %26 : vector<16x64xf32>
    %28 = arith.truncf %27 : vector<16x64xf32> to vector<16x64xbf16>
    %c0_12 = arith.constant 0 : index
    %c0_13 = arith.constant 0 : index
    %29 = vector.load %arg4[%c0_12, %c0_13] : memref<16x64xbf16, #tpu.memory_space<vmem>>, vector<16x64xbf16>
    tpu.vector_store %arg4[%c0_12, %c0_13], %28 {strides = array<i32>} : memref<16x64xbf16, #tpu.memory_space<vmem>>, vector<16x64xbf16>,
    return
  }
  func.func @transform_0(%arg0: i32) -> (i32, i32) {
    %c0_i32 = arith.constant 0 : i32
    %c0_i32_0 = arith.constant 0 : i32
    return %arg0, %c0_i32 : i32, i32
  }
  func.func @transform_1(%arg0: i32) -> (i32, i32) {
    %c0_i32 = arith.constant 0 : i32
    %c0_i32_0 = arith.constant 0 : i32
    %c0_i32_1 = arith.constant 0 : i32
    return %c0_i32, %c0_i32_0 : i32, i32
  }
  func.func @transform_2(%arg0: i32) -> (i32, i32) {
    %c0_i32 = arith.constant 0 : i32
    %c0_i32_0 = arith.constant 0 : i32
    %c0_i32_1 = arith.constant 0 : i32
    return %c0_i32, %c0_i32_0 : i32, i32
  }
  func.func @transform_3(%arg0: i32) -> (i32, i32) {
    %c0_i32 = arith.constant 0 : i32
    %c0_i32_0 = arith.constant 0 : i32
    return %arg0, %c0_i32 : i32, i32
  }
}

</mosaic_0001>

<llo_original>
// kernel: tpu_custom_call.1
$region0: #{tpu_custom_call.1}
  #allocation0 [shape = 'u32[]', space=smem, size = 0x4, offset = 0x4, fixed_abs, tag = 'smem constant byte address 0x4 - core index']
  #allocation1 [shape = 'u32[72,128]{1,0:T(1,128)}', space=vmem, size = 0x9000, scoped, tag = 'internal scratch']
  %s0 = inlined_call_operand.vmem [shape: bf16[32,147], index: 0, kind: input, shape index: {}]
  %s1 = inlined_call_operand.vmem [shape: bf16[147,64], index: 1, kind: input, shape index: {}]
  %s2 = inlined_call_operand.vmem [shape: f32[3,64], index: 2, kind: input, shape index: {}]
  %s3 = inlined_call_operand.hbm [shape: bf16[32,64], index: 3, kind: output, shape index: {}]
  %s4 = sld [smem:[#allocation0]]
  $region45: #{tpu_custom_call.1} parent=0
    _
  %s6 = ssub.s32 1, %s4
  %s7 = scalar_select 0, %s6, %s4
  $region1: #{tpu_custom_call.1} parent=0
    #allocation2 [shape = 'u8[8192]{0}', space=vmem, size = 0x2000, scoped, tag = 'output window, operand 0']
    #allocation3 [shape = 's32[2]{0}', space=sflag, size = 0x8, scoped, tag = 'scoped memory for tpu_custom_call.1']
    %8 = vsyncpa [#allocation3], 0
    %s9 = scalar_lea.sflag [#allocation3], 1
    %10 = vsyncpa %s9, 0
    loop: start=0, step=1, limit=4
    $region2: #{tpu_custom_call.1} parent=1 // loop_pre_header
      _
    $region3: #{tpu_custom_call.1} parent=1 // loop_header
      %s12 = sphi 0, %s16
      %p13 = scmp.ge.s32.totalorder %s12, 4
      %s22 = sphi 0, %s24
      %s25 = sphi 0, %s22
      %s26 = sphi 0, %s25
      %s42 = sphi 0, %s26
      %s46 = sphi 0, %s46
      %s48 = sphi 0, %s46
      %s49 = sphi 0, %s48
      %s63 = sphi 0, %s49
      %s67 = sphi 0, %s67
      %s69 = sphi 0, %s67
      %s70 = sphi 0, %s69
      %s84 = sphi 0, %s70
      %s90 = sphi 0, %s92
      %s93 = sphi 0, %s90
      %s94 = sphi 0, %s93
      %s110 = sphi 0, %s94
    $region4: #{tpu_custom_call.1} parent=1 // loop_header_branch
      %15 = sbr.rel (%p13) target = $region8
    $region5: #{tpu_custom_call.1} parent=1 // loop_body
      %s17 = ssub.s32 %s12, 1
      %s18 = ssub.s32 %s12, 2
      %s19 = sadd.s32 %s12, 1
      %s20 = ssub.s32 %s12, %s19
      %p21 = scmp.eq.s32.totalorder %s20, 0
      %s23 = sadd.s32 %s22, 1
      %s24 = scalar_select %p21, %s22, %s23
      %p27 = pneg %p21
      %p28 = scmp.eq.s32.totalorder %s12, 1
      %p29 = por %p27, %p28
      %p30 = scmp.ne.s32.totalorder %s22, %s25
      %p31 = scmp.eq.s32.totalorder %s12, 0
      %p32 = por %p30, %p31
      %p33 = scmp.ne.s32.totalorder %s22, %s25
      %p34 = scmp.eq.s32.totalorder %s17, 1
      %p35 = por %p33, %p34
      %p36 = scmp.ne.s32.totalorder %s25, %s26
      %p37 = scmp.eq.s32.totalorder %s17, 0
      %p38 = por %p36, %p37
      %p39 = scmp.ne.s32.totalorder %s25, %s26
      %p40 = scmp.eq.s32.totalorder %s18, 1
      %p41 = por %p39, %p40
      %p43 = scmp.ne.s32.totalorder %s26, %s42
      %p44 = scmp.eq.s32.totalorder %s18, 0
      %p45 = por %p43, %p44
      %s47 = sadd.s32 %s46, 1
      %p50 = scmp.eq.s32.totalorder %s12, 1
      %p51 = scmp.ne.s32.totalorder %s46, %s48
      %p52 = scmp.eq.s32.totalorder %s12, 0
      %p53 = por %p51, %p52
      %p54 = scmp.ne.s32.totalorder %s46, %s48
      %p55 = scmp.eq.s32.totalorder %s17, 1
      %p56 = por %p54, %p55
      %p57 = scmp.ne.s32.totalorder %s48, %s49
      %p58 = scmp.eq.s32.totalorder %s17, 0
      %p59 = por %p57, %p58
      %p60 = scmp.ne.s32.totalorder %s48, %s49
      %p61 = scmp.eq.s32.totalorder %s18, 1
      %p62 = por %p60, %p61
      %p64 = scmp.ne.s32.totalorder %s49, %s63
      %p65 = scmp.eq.s32.totalorder %s18, 0
      %p66 = por %p64, %p65
      %s68 = sadd.s32 %s67, 1
      %p71 = scmp.eq.s32.totalorder %s12, 1
      %p72 = scmp.ne.s32.totalorder %s67, %s69
      %p73 = scmp.eq.s32.totalorder %s12, 0
      %p74 = por %p72, %p73
      %p75 = scmp.ne.s32.totalorder %s67, %s69
      %p76 = scmp.eq.s32.totalorder %s17, 1
      %p77 = por %p75, %p76
      %p78 = scmp.ne.s32.totalorder %s69, %s70
      %p79 = scmp.eq.s32.totalorder %s17, 0
      %p80 = por %p78, %p79
      %p81 = scmp.ne.s32.totalorder %s69, %s70
      %p82 = scmp.eq.s32.totalorder %s18, 1
      %p83 = por %p81, %p82
      %p85 = scmp.ne.s32.totalorder %s70, %s84
      %p86 = scmp.eq.s32.totalorder %s18, 0
      %p87 = por %p85, %p86
      %s88 = ssub.s32 %s12, %s19
      %p89 = scmp.eq.s32.totalorder %s88, 0
      %s91 = sadd.s32 %s90, 1
      %s92 = scalar_select %p89, %s90, %s91
      %p95 = pneg %p89
      %p96 = scmp.eq.s32.totalorder %s12, 1
      %p97 = por %p95, %p96
      %p98 = scmp.ne.s32.totalorder %s90, %s93
      %p99 = scmp.eq.s32.totalorder %s12, 0
      %p100 = por %p98, %p99
      %p101 = scmp.ne.s32.totalorder %s90, %s93
      %p102 = scmp.eq.s32.totalorder %s17, 1
      %p103 = por %p101, %p102
      %p104 = scmp.ne.s32.totalorder %s93, %s94
      %p105 = scmp.eq.s32.totalorder %s17, 0
      %p106 = por %p104, %p105
      %p107 = scmp.ne.s32.totalorder %s93, %s94
      %p108 = scmp.eq.s32.totalorder %s18, 1
      %p109 = por %p107, %p108
      %p111 = scmp.ne.s32.totalorder %s94, %s110
      %p112 = scmp.eq.s32.totalorder %s18, 0
      %p113 = por %p111, %p112
      %p114 = scmp.le.s32.totalorder 1, %s12
      %p115 = scmp.lt.s32.totalorder %s12, 3
      %p116 = pnand %p114, %p115
      %p117 = pneg %p116
      // Predicated region
      $region9: #{tpu_custom_call.1} parent=5 // pred_check
        _
      $region10: #{tpu_custom_call.1} parent=5 // pred_check_branch
        %119 = sbr.rel (%p116) target = $region12
      $region11: #{tpu_custom_call.1} parent=5 // pred_region
        %s120 = ssub.s32 %s12, 1
        // Predicated region
        $region13: #{tpu_custom_call.1} parent=11 // pred_check
          %p121 = pneg %p59
        $region14: #{tpu_custom_call.1} parent=11 // pred_check_branch
          %123 = sbr.rel (%p121) target = $region16
        $region15: #{tpu_custom_call.1} parent=11 // pred_region
          _
        $region16: #{tpu_custom_call.1} parent=11 // pred_fallthru
          _
        // Predicated region
        $region17: #{tpu_custom_call.1} parent=11 // pred_check
          %p124 = pneg %p80
        $region18: #{tpu_custom_call.1} parent=11 // pred_check_branch
          %126 = sbr.rel (%p124) target = $region20
        $region19: #{tpu_custom_call.1} parent=11 // pred_region
          _
        $region20: #{tpu_custom_call.1} parent=11 // pred_fallthru
          _
      $region12: #{tpu_custom_call.1} parent=5 // pred_fallthru
        _
      %p127 = scmp.lt.s32.totalorder %s12, 2
      // Predicated region
      $region21: #{tpu_custom_call.1} parent=5 // pred_check
        %p128 = pneg %p127
      $region22: #{tpu_custom_call.1} parent=5 // pred_check_branch
        %130 = sbr.rel (%p128) target = $region24
      $region23: #{tpu_custom_call.1} parent=5 // pred_region
        // Predicated region
        $region25: #{tpu_custom_call.1} parent=23 // pred_check
          %p131 = pneg %p32
        $region26: #{tpu_custom_call.1} parent=23 // pred_check_branch
          %133 = sbr.rel (%p131) target = $region28
        $region27: #{tpu_custom_call.1} parent=23 // pred_region
          %s134 = smul.u32 2, %s12
          %p135 = scmp.lt.s32.totalorder %s134, 3
          %s136 = scalar_select %p135, %s134, 3
          %s137 = smul.addr %s136, 2
          %s138 = smul.addr %s137, 4
          %s139 = scalar_lea.vmem %s0, %s138
          %s140 = smul.u32 2, %s12
        $region28: #{tpu_custom_call.1} parent=23 // pred_fallthru
          _
      $region24: #{tpu_custom_call.1} parent=5 // pred_fallthru
        _
      %p141 = scmp.le.s32.totalorder 1, %s12
      %p142 = scmp.lt.s32.totalorder %s12, 3
      %p143 = pnand %p141, %p142
      %p144 = pneg %p143
      // Predicated region
      $region29: #{tpu_custom_call.1} parent=5 // pred_check
        _
      $region30: #{tpu_custom_call.1} parent=5 // pred_check_branch
        %146 = sbr.rel (%p143) target = $region32
      $region31: #{tpu_custom_call.1} parent=5 // pred_region
        %s147 = ssub.s32 %s12, 1
        %s148 = smul.u32 2, %s17
        %p149 = scmp.lt.s32.totalorder %s148, 3
        %s150 = scalar_select %p149, %s148, 3
        %s151 = smul.addr %s150, 2
        %s152 = smul.addr %s151, 4
        %s153 = scalar_lea.vmem %s0, %s152
        %p154 = pneg %p38
        %p155 = pneg %p35
        %p156 = pneg %p59
        %p157 = pneg %p56
        %p158 = pneg %p80
        %p159 = pneg %p77
        %p160 = pneg %p106
        %p161 = pneg %p103
        %s162 = sand.u32 %s93, 1
        %s163 = scalar_lea.sflag [#allocation3], %s162
        %s164 = sand.u32 %s93, 1
        %s165 = smul.addr %s164, 8
        %s166 = scalar_lea.vmem [#allocation2], %s165
        %s167 = smul.u32 2, %s17
        %p168 = scmp.lt.s32.totalorder %s167, 3
        %s169 = scalar_select %p168, %s167, 3
        %s170 = smul.addr %s169, 2
        %s171 = smul.addr %s170, 4
        %s172 = scalar_lea.vmem %s0, %s171
        %s173 = smul.u32 2, %s17
        %s174 = smul.u32 2, %s17
        %v176 = vld [vmem:[%s172] sm:$0xff]
        %v177 = vld [vmem:[%s172 + $0x8] sm:$0xff]
        %v178 = vld [vmem:[%s1] sm:$0xf]
        %v179 = vld [vmem:[%s1 + $0x4] sm:$0xf]
        %v180 = vld [vmem:[%s1 + $0x8] sm:$0xf]
        %v181 = vld [vmem:[%s1 + $0xc] sm:$0xf]
        %v182 = vld [vmem:[%s1 + $0x10] sm:$0xf]
        %v183 = vld [vmem:[%s1 + $0x14] sm:$0xf]
        %v184 = vld [vmem:[%s1 + $0x18] sm:$0xf]
        %v185 = vld [vmem:[%s1 + $0x1c] sm:$0xf]
        %v186 = vld [vmem:[%s1 + $0x20] sm:$0xf]
        %v187 = vld [vmem:[%s1 + $0x24] sm:$0xf]
        %v188 = vld [vmem:[%s1 + $0x28] sm:$0xf]
        %v189 = vld [vmem:[%s1 + $0x2c] sm:$0xf]
        %v190 = vld [vmem:[%s1 + $0x30] sm:$0xf]
        %v191 = vld [vmem:[%s1 + $0x34] sm:$0xf]
        %v192 = vld [vmem:[%s1 + $0x38] sm:$0xf]
        %v193 = vld [vmem:[%s1 + $0x3c] sm:$0xf]
        %v194 = vld [vmem:[%s1 + $0x40] sm:$0xf]
        %v195 = vld [vmem:[%s1 + $0x44] sm:$0xf]
        %v196 = vld [vmem:[%s1 + $0x48] sm:$0x3]
        %v197 = vld [vmem:[%s2] sm:$0x1]
        %v198 = vperm.slane %v197, 0
        %v201 = vunpack.c.l.b16 %v176
        %v202 = vunpack.c.h.b16 %v176
        %v203 = vunpack.c.l.b16 %v177
        %v204 = vunpack.c.h.b16 %v177
        %v205 = vpack.c.b16 %v203, %v201
        %v206 = vpack.c.b16 %v204, %v202
        %v227 = vunpack.c.l.b16 %v178
        %v228 = vunpack.c.l.b16 %v179
        %v229 = vunpack.c.l.b16 %v180
        %v230 = vunpack.c.l.b16 %v181
        %v231 = vunpack.c.l.b16 %v182
        %v232 = vunpack.c.l.b16 %v183
        %v233 = vunpack.c.l.b16 %v184
        %v234 = vunpack.c.l.b16 %v185
        %v235 = vunpack.c.l.b16 %v186
        %v236 = vunpack.c.l.b16 %v187
        %v237 = vunpack.c.l.b16 %v188
        %v238 = vunpack.c.l.b16 %v189
        %v239 = vunpack.c.l.b16 %v190
        %v240 = vunpack.c.l.b16 %v191
        %v241 = vunpack.c.l.b16 %v192
        %v242 = vunpack.c.l.b16 %v193
        %v243 = vunpack.c.l.b16 %v194
        %v244 = vunpack.c.l.b16 %v195
        %v245 = vunpack.c.l.b16 %v196
        %v246 = vpack.c.b16 %v228, %v227
        %v247 = vpack.c.b16 %v230, %v229
        %v248 = vpack.c.b16 %v232, %v231
        %v249 = vpack.c.b16 %v234, %v233
        %v250 = vpack.c.b16 %v236, %v235
        %v251 = vpack.c.b16 %v238, %v237
        %v252 = vpack.c.b16 %v240, %v239
        %v253 = vpack.c.b16 %v242, %v241
        %v254 = vpack.c.b16 %v244, %v243
        %v255 = vpack.c.b16 %v245, %v245
        %vm265 = vcmask 154624
        %v267 = vsel %vm265, %v206, 0
        %vm269 = vcmask 1040384
        %vm270 = vcmask 1041408
        %v271 = vsel %vm269, 4294967295, 65535
        %v272 = vsel %vm270, %v271, 0
        %v274 = vand.u32 %v255, %v272
        %276 = vmatpush.bf16.msra.mxu0 %v253
        %277 = vmatpush.bf16.msra.mxu0 %v252
        %278 = vmatpush.bf16.msra.mxu0 %v251
        %279 = vmatpush.bf16.msra.mxu0 %v250
        %280 = vmatpush.bf16.msra.mxu0 %v249
        %281 = vmatpush.bf16.msra.mxu0 %v248
        %282 = vmatpush.bf16.msra.mxu0 %v247
        %283 = vmatpush.bf16.msra.mxu0 %v246
        %284 = vmatmul.bf16.gmra.mxu0 %v205
        %v285 = vpop.f32.mrf.mxu0
        %v286 = vadd.f32 %v198, %v285
        %v287 = vpop.f32.mrf.mxu0
        %v288 = vadd.f32 %v198, %v287
        %289 = vdwg.mxu0
        %290 = vmatpush.bf16.msra.mxu0 0
        %291 = vmatpush.bf16.msra.mxu0 0
        %292 = vmatpush.bf16.msra.mxu0 0
        %293 = vmatpush.bf16.msra.mxu0 0
        %294 = vmatpush.bf16.msra.mxu0 0
        %295 = vmatpush.bf16.msra.mxu0 0
        %296 = vmatpush.bf16.msra.mxu0 %v274
        %297 = vmatpush.bf16.msra.mxu0 %v254
        %298 = vmatmul.bf16.gmra.mxu0 %v267
        %v299 = vpop.f32.mrf.mxu0
        %v300 = vadd.f32 %v286, %v299
        %v301 = vpop.f32.mrf.mxu0
        %v302 = vadd.f32 %v288, %v301
        %303 = vdwg.mxu0
        %vm304 = vcmask 523264
        %v305 = vsel %vm304, %v300, 0.0
        %306 = vadd.xlane.f32.xlu0 %v305
        %v307 = vpop.xlane.xlu0 %306
        %v308 = vsel %vm304, %v302, 0.0
        %309 = vadd.xlane.f32.xlu0 %v308
        %v310 = vpop.xlane.xlu0 %309
        %v311 = vmul.f32 %v307, 0.015625
        %v312 = vmul.f32 %v310, 0.015625
        %v313 = vsub.f32 %v300, %v311
        %v314 = vsub.f32 %v302, %v312
        %v315 = vmul.f32 %v313, %v313
        %v316 = vmul.f32 %v314, %v314
        %v317 = vsel %vm304, %v315, 0.0
        %318 = vadd.xlane.f32.xlu0 %v317
        %v319 = vpop.xlane.xlu0 %318
        %v320 = vsel %vm304, %v316, 0.0
        %321 = vadd.xlane.f32.xlu0 %v320
        %v322 = vpop.xlane.xlu0 %321
        %v323 = vmul.f32 %v319, 0.015625
        %v324 = vmul.f32 %v322, 0.015625
        %v325 = vadd.f32 %v323, 1e-05
        %v326 = vadd.f32 %v324, 1e-05
        %v327 = vrsqrt.pop %v325
        %v328 = vmul.f32 %v327, %v325
        %v329 = vmul.f32 %v328, %v327
        %v330 = vmul.f32 0.5, %v329
        %v331 = vsub.f32 1.5, %v330
        %v332 = vmul.f32 %v327, %v331
        %vm333 = vweird.f32 %v325
        %vm334 = vweird.f32 %v327
        %vm335 = vmor %vm333, %vm334
        %v336 = vsel %vm335, %v327, %v332
        %v337 = vrsqrt.pop %v326
        %v338 = vmul.f32 %v337, %v326
        %v339 = vmul.f32 %v338, %v337
        %v340 = vmul.f32 0.5, %v339
        %v341 = vsub.f32 1.5, %v340
        %v342 = vmul.f32 %v337, %v341
        %vm343 = vweird.f32 %v326
        %vm344 = vweird.f32 %v337
        %vm345 = vmor %vm343, %vm344
        %v346 = vsel %vm345, %v337, %v342
        %v347 = vld [vmem:[%s2 + $0x1] sm:$0x1]
        %v348 = vperm.slane %v347, 0
        %v349 = vmul.f32 %v336, %v348
        %v350 = vmul.f32 %v346, %v348
        %v351 = vmul.f32 %v313, %v349
        %v352 = vmul.f32 %v314, %v350
        %v353 = vld [vmem:[%s2 + $0x2] sm:$0x1]
        %v354 = vperm.slane %v353, 0
        %v355 = vadd.f32 %v351, %v354
        %v356 = vadd.f32 %v352, %v354
        %v357 = vpack.c.bf16 %v355, %v355
        %v358 = vpack.c.bf16 %v356, %v356
        %vm359 = vcmask 519168
        %360 = vst.msk [vmem:[%s166] sm:$0xf] %vm359, %v357
        %361 = vst.msk [vmem:[%s166 + $0x4] sm:$0xf] %vm359, %v358
        %s362 = sand.u32 %s93, 1
        %s363 = scalar_lea.sflag [#allocation3], %s362
        %s364 = sand.u32 %s93, 1
        %s365 = smul.addr %s364, 8
        %s366 = scalar_lea.vmem [#allocation2], %s365
        // Predicated region
        $region33: #{tpu_custom_call.1} parent=31 // pred_check
          %p367 = pneg %p103
        $region34: #{tpu_custom_call.1} parent=31 // pred_check_branch
          %369 = sbr.rel (%p367) target = $region36
        $region35: #{tpu_custom_call.1} parent=31 // pred_region
          %s370 = smul.u32 2, %s17
          %372 = vsyncadd %s363, 0
          %s373 = smul.addr %s370, 4
          %s374 = scalar_lea.hbm %s3, %s373
          %s375 = sshll.u32 %s366, 4
          %s376 = int_to_ptr.vmem [resolvable:$true] %s375
          %s377 = sshll.u32 %s374, 4
          %s378 = int_to_ptr.hbm [resolvable:$true] %s377
          %383 = dma.vmem_to_hbm [thread:$0]  %s376, 128, %s378, %s363, 64, 64, 4
        $region36: #{tpu_custom_call.1} parent=31 // pred_fallthru
          _
      $region32: #{tpu_custom_call.1} parent=5 // pred_fallthru
        _
      %p384 = scmp.le.s32.totalorder 2, %s12
      // Predicated region
      $region37: #{tpu_custom_call.1} parent=5 // pred_check
        %p385 = pneg %p384
      $region38: #{tpu_custom_call.1} parent=5 // pred_check_branch
        %387 = sbr.rel (%p385) target = $region40
      $region39: #{tpu_custom_call.1} parent=5 // pred_region
        %s388 = ssub.s32 %s12, 2
        // Predicated region
        $region41: #{tpu_custom_call.1} parent=39 // pred_check
          %p389 = pneg %p109
        $region42: #{tpu_custom_call.1} parent=39 // pred_check_branch
          %391 = sbr.rel (%p389) target = $region44
        $region43: #{tpu_custom_call.1} parent=39 // pred_region
          %s392 = sand.u32 %s94, 1
          %s393 = scalar_lea.sflag [#allocation3], %s392
          %s394 = sand.u32 %s94, 1
          %s395 = smul.addr %s394, 8
          %s396 = scalar_lea.vmem [#allocation2], %s395
          %398 = dma.done %s393, 128
        $region44: #{tpu_custom_call.1} parent=39 // pred_fallthru
          _
      $region40: #{tpu_custom_call.1} parent=5 // pred_fallthru
        _
    $region6: #{tpu_custom_call.1} parent=1 // loop_footer
      %s16 = sadd.s32 1, %s12
    $region7: #{tpu_custom_call.1} parent=1 // loop_footer_branch
      %11 = sbr.rel target = $region3
    $region8: #{tpu_custom_call.1} parent=1 // loop_exit
      _
    %399 = vsyncpa [#allocation3], 1
    %s400 = scalar_lea.sflag [#allocation3], 1
    %401 = vsyncpa %s400, 1

</llo_original>
